<compile_context>
chip_gen: v7x
topology: tpu7x:2x2x1
jax: 0.10.0
libtpu: 0.0.40
codegen_flags: <defaults>
</compile_context>

<pallas_src>
import functools

import jax
import jax.numpy as jnp
from jax.experimental import pallas as pl
from jax.experimental.pallas import tpu as pltpu


def policy_net_kernel(x_ref, w1_ref, b1_ref, w2_ref, b2_ref, w3_ref, b3_ref,
                      out_ref):
    # fc1 + ReLU.  K = input_dim (tiny), done in f32 to preserve raw state.
    h1 = jnp.dot(x_ref[...], w1_ref[...], preferred_element_type=jnp.float32)
    h1 = jnp.maximum(h1 + b1_ref[...], 0.0)

    # fc2 + ReLU  (bf16 MXU operands, f32 accumulate / elementwise).
    h2 = jnp.dot(h1.astype(w2_ref.dtype), w2_ref[...],
                 preferred_element_type=jnp.float32)
    h2 = jnp.maximum(h2 + b2_ref[...], 0.0)

    # fc3 (output dim padded to 128 lanes; padded bias columns are -inf).
    logits = jnp.dot(h2.astype(w3_ref.dtype), w3_ref[...],
                     preferred_element_type=jnp.float32)
    logits = logits + b3_ref[...]

    # Numerically stable, exactly-normalized softmax over the padded last axis.
    # Padded columns have logits == -inf -> exp == 0, so the result over the
    # real columns is identical to the unpadded softmax.
    m = jnp.max(logits, axis=-1, keepdims=True)
    e = jnp.exp(logits - m)
    denom = jnp.sum(e, axis=-1, keepdims=True)
    out_ref[...] = (e / denom).astype(out_ref.dtype)


def _round_up(n, m):
    return ((n + m - 1) // m) * m


def prepare_params(params):
    """One-time parameter prep (call at init / after each optimizer update).

    Pads fc3 to 128 output lanes (zero weight cols, -inf bias cols) and casts
    the large weights to bf16 so the per-call forward does no parameter work.
    Returns (prepared_params, out_dim).
    """
    out_dim = params["w3"].shape[1]
    out_pad = _round_up(out_dim, 128)
    w3p = jnp.pad(params["w3"], ((0, 0), (0, out_pad - out_dim)))
    b3p = jnp.pad(params["b3"], ((0, 0), (0, out_pad - out_dim)),
                  constant_values=-jnp.inf)
    prepared = {
        "w1": params["w1"].astype(jnp.float32),   # fc1 stays f32 (K is tiny)
        "b1": params["b1"].astype(jnp.float32),
        "w2": params["w2"].astype(jnp.bfloat16),
        "b2": params["b2"].astype(jnp.float32),
        "w3": w3p.astype(jnp.bfloat16),
        "b3": b3p.astype(jnp.float32),
    }
    return prepared, out_dim


@functools.partial(jax.jit, static_argnames=("out_dim", "block_batch"))
def policy_net_forward(x, prepared, *, out_dim, block_batch=2048):
    """x: (B, input_dim) float32. prepared: output of prepare_params()."""
    w1, b1 = prepared["w1"], prepared["b1"]
    w2, b2 = prepared["w2"], prepared["b2"]
    w3, b3 = prepared["w3"], prepared["b3"]

    B, input_dim = x.shape
    out_pad = w3.shape[1]

    # --- balanced batch tiling ----------------------------------------------
    # Smallest number of (near-)equal tiles with tile <= block_batch; minimizes
    # last-tile padding (e.g. B=300, block_batch=128 -> 3 tiles of 112 rows).
    n_tiles = max(1, -(-B // block_batch))
    # Give v7x's two TensorCores work on large single-tile batches.
    if n_tiles == 1 and B >= 1024:
        n_tiles = 2
    tb = _round_up(-(-B // n_tiles), 16)
    b_pad = tb * n_tiles
    xp = jnp.pad(x, ((0, b_pad - B), (0, 0)))

    # Weights/biases: full-array blocks, constant index map -> VMEM-resident.
    def const(a):
        nd = a.ndim
        return pl.BlockSpec(a.shape, lambda i, _nd=nd: (0,) * _nd)

    flops = 2 * b_pad * (input_dim * 128 + 128 * 256 + 256 * out_pad)
    bytes_accessed = (xp.size * 4                       # x tiles (f32)
                      + b_pad * out_pad * 2             # out tiles (bf16)
                      + w1.size * 4 + (w2.size + w3.size) * 2
                      + (b1.size + b2.size + b3.size) * 4)
    cost = pl.CostEstimate(flops=flops,
                           transcendentals=b_pad * out_pad,
                           bytes_accessed=bytes_accessed)

    out = pl.pallas_call(
        policy_net_kernel,
        out_shape=jax.ShapeDtypeStruct((b_pad, out_pad), jnp.bfloat16),
        grid=(n_tiles,),
        in_specs=[
            pl.BlockSpec((tb, input_dim), lambda i: (i, 0)),   # x tile
            const(w1), const(b1),
            const(w2), const(b2),
            const(w3), const(b3),
        ],
        out_specs=pl.BlockSpec((tb, out_pad), lambda i: (i, 0)),
        compiler_params=pltpu.CompilerParams(
            dimension_semantics=("parallel",),
            # Large tiles need > v5e's 16 MiB scoped default; stay well under
            # v7x's 64 MiB/TC physical VMEM.
            vmem_limit_bytes=48 * 1024 * 1024),
        cost_estimate=cost,
    )(xp, w1, b1, w2, b2, w3, b3)

    # Drop batch padding and padded softmax columns (exactly 0); return f32.
    return out[:B, :out_dim].astype(jnp.float32)


def policy_net_reference(x, params):
    h1 = jnp.maximum(x @ params["w1"] + params["b1"], 0.0)
    h2 = jnp.maximum(h1 @ params["w2"] + params["b2"], 0.0)
    logits = h2 @ params["w3"] + params["b3"]
    return jax.nn.softmax(logits, axis=-1)


def init_params(key, input_dim, output_dim):
    """Deterministic init; weights stored as (in, out) = PyTorch W^T."""
    ks = jax.random.split(key, 6)

    def linear(kw, kb, fan_in, fan_out):
        # PyTorch nn.Linear default: U(-1/sqrt(fan_in), 1/sqrt(fan_in))
        bound = 1.0 / jnp.sqrt(fan_in)
        w = jax.random.uniform(kw, (fan_in, fan_out), jnp.float32, -bound, bound)
        b = jax.random.uniform(kb, (1, fan_out), jnp.float32, -bound, bound)
        return w, b

    w1, b1 = linear(ks[0], ks[1], input_dim, 128)
    w2, b2 = linear(ks[2], ks[3], 128, 256)
    w3, b3 = linear(ks[4], ks[5], 256, output_dim)
    return {"w1": w1, "b1": b1, "w2": w2, "b2": b2, "w3": w3, "b3": b3}


if __name__ == "__main__":
    key = jax.random.PRNGKey(0)
    k_x, k_x2, k_p = jax.random.split(key, 3)

    input_dim, output_dim = 4, 2            # CartPole-style state / actions
    params = init_params(k_p, input_dim, output_dim)
    prepared, out_dim = prepare_params(params)

    # Small single-tile case.
    x_small = jax.random.normal(k_x, (8, input_dim), jnp.float32)
    probs = jax.block_until_ready(
        policy_net_forward(x_small, prepared, out_dim=out_dim))
    ref = policy_net_reference(x_small, params)
    assert probs.shape == (8, output_dim)
    assert jnp.allclose(jnp.sum(probs, axis=-1), 1.0, atol=1e-2)
    assert jnp.allclose(probs, ref, atol=2e-2), "mismatch vs reference (small)"

    # Multi-tile ragged batch (exercises balanced tiling: 3 tiles of 112 rows).
    x_big = jax.random.normal(k_x2, (300, input_dim), jnp.float32)
    probs_big = jax.block_until_ready(
        policy_net_forward(x_big, prepared, out_dim=out_dim, block_batch=128))
    ref_big = policy_net_reference(x_big, params)
    assert probs_big.shape == (300, output_dim)
    assert jnp.allclose(jnp.sum(probs_big, axis=-1), 1.0, atol=1e-2)
    assert jnp.allclose(probs_big, ref_big, atol=2e-2), "mismatch vs reference (big)"

    print("KERNEL_OK")
</pallas_src>

<mosaic_0001>
module attributes {stable_mosaic.version = 11 : i64} {
  func.func @policy_net_kernel(%arg0: i32, %arg1: memref<16x4xf32, #tpu.memory_space<vmem>>, %arg2: memref<4x128xf32, #tpu.memory_space<vmem>>, %arg3: memref<1x128xf32, #tpu.memory_space<vmem>>, %arg4: memref<128x256xbf16, #tpu.memory_space<vmem>>, %arg5: memref<1x256xf32, #tpu.memory_space<vmem>>, %arg6: memref<256x128xbf16, #tpu.memory_space<vmem>>, %arg7: memref<1x128xf32, #tpu.memory_space<vmem>>, %arg8: memref<16x128xbf16, #tpu.memory_space<vmem>>) attributes {dimension_semantics = [#tpu.dimension_semantics<parallel>], iteration_bounds = array<i64: 1>, scalar_prefetch = 0 : i64, scratch_operands = 0 : i64, tpu.core_type = #tpu.core_type<tc>, window_params = [{transform_indices = @transform_0, window_bounds = array<i64: 16, 4>}, {pipeline_mode = #tpu.pipeline_mode<synchronous>, transform_indices = @transform_1, window_bounds = array<i64: 4, 128>}, {pipeline_mode = #tpu.pipeline_mode<synchronous>, transform_indices = @transform_2, window_bounds = array<i64: 1, 128>}, {pipeline_mode = #tpu.pipeline_mode<synchronous>, transform_indices = @transform_3, window_bounds = array<i64: 128, 256>}, {pipeline_mode = #tpu.pipeline_mode<synchronous>, transform_indices = @transform_4, window_bounds = array<i64: 1, 256>}, {pipeline_mode = #tpu.pipeline_mode<synchronous>, transform_indices = @transform_5, window_bounds = array<i64: 256, 128>}, {pipeline_mode = #tpu.pipeline_mode<synchronous>, transform_indices = @transform_6, window_bounds = array<i64: 1, 128>}, {transform_indices = @transform_7, window_bounds = array<i64: 16, 128>}]} {
    %c0 = arith.constant 0 : index
    %c0_0 = arith.constant 0 : index
    %0 = vector.load %arg1[%c0, %c0_0] : memref<16x4xf32, #tpu.memory_space<vmem>>, vector<16x4xf32>
    %c0_1 = arith.constant 0 : index
    %c0_2 = arith.constant 0 : index
    %1 = vector.load %arg2[%c0_1, %c0_2] : memref<4x128xf32, #tpu.memory_space<vmem>>, vector<4x128xf32>
    %cst = arith.constant dense<0.000000e+00> : vector<16x128xf32>
    %2 = tpu.matmul %0, %1, %cst {dimension_numbers = #tpu.dot_dimension_numbers<[1], [0], [0], [1], [0, 0, 1, 1], [], []>} : vector<16x4xf32>, vector<4x128xf32>, vector<16x128xf32> -> vector<16x128xf32>
    %c0_3 = arith.constant 0 : index
    %c0_4 = arith.constant 0 : index
    %3 = vector.load %arg3[%c0_3, %c0_4] : memref<1x128xf32, #tpu.memory_space<vmem>>, vector<1x128xf32>
    %4 = vector.broadcast %3 : vector<1x128xf32> to vector<16x128xf32>
    %5 = arith.addf %2, %4 : vector<16x128xf32>
    %cst_5 = arith.constant 0.000000e+00 : f32
    %6 = vector.broadcast %cst_5 : f32 to vector<16x128xf32>
    %7 = arith.maximumf %5, %6 : vector<16x128xf32>
    %8 = arith.truncf %7 : vector<16x128xf32> to vector<16x128xbf16>
    %c0_6 = arith.constant 0 : index
    %c0_7 = arith.constant 0 : index
    %9 = vector.load %arg4[%c0_6, %c0_7] : memref<128x256xbf16, #tpu.memory_space<vmem>>, vector<128x256xbf16>
    %cst_8 = arith.constant dense<0.000000e+00> : vector<16x256xf32>
    %10 = tpu.matmul %8, %9, %cst_8 {dimension_numbers = #tpu.dot_dimension_numbers<[1], [0], [0], [1], [0, 0, 1, 1], [], []>} : vector<16x128xbf16>, vector<128x256xbf16>, vector<16x256xf32> -> vector<16x256xf32>
    %c0_9 = arith.constant 0 : index
    %c0_10 = arith.constant 0 : index
    %11 = vector.load %arg5[%c0_9, %c0_10] : memref<1x256xf32, #tpu.memory_space<vmem>>, vector<1x256xf32>
    %12 = vector.broadcast %11 : vector<1x256xf32> to vector<16x256xf32>
    %13 = arith.addf %10, %12 : vector<16x256xf32>
    %cst_11 = arith.constant 0.000000e+00 : f32
    %14 = vector.broadcast %cst_11 : f32 to vector<16x256xf32>
    %15 = arith.maximumf %13, %14 : vector<16x256xf32>
    %16 = arith.truncf %15 : vector<16x256xf32> to vector<16x256xbf16>
    %c0_12 = arith.constant 0 : index
    %c0_13 = arith.constant 0 : index
    %17 = vector.load %arg6[%c0_12, %c0_13] : memref<256x128xbf16, #tpu.memory_space<vmem>>, vector<256x128xbf16>
    %cst_14 = arith.constant dense<0.000000e+00> : vector<16x128xf32>
    %18 = tpu.matmul %16, %17, %cst_14 {dimension_numbers = #tpu.dot_dimension_numbers<[1], [0], [0], [1], [0, 0, 1, 1], [], []>} : vector<16x256xbf16>, vector<256x128xbf16>, vector<16x128xf32> -> vector<16x128xf32>
    %c0_15 = arith.constant 0 : index
    %c0_16 = arith.constant 0 : index
    %19 = vector.load %arg7[%c0_15, %c0_16] : memref<1x128xf32, #tpu.memory_space<vmem>>, vector<1x128xf32>
    %20 = vector.broadcast %19 : vector<1x128xf32> to vector<16x128xf32>
    %21 = arith.addf %18, %20 : vector<16x128xf32>
    %cst_17 = arith.constant dense<0xFF800000> : vector<16xf32>
    %22 = vector.multi_reduction <maximumf>, %21, %cst_17 [1] : vector<16x128xf32> to vector<16xf32>
    %23 = vector.shape_cast %22 : vector<16xf32> to vector<16x1xf32>
    %24 = vector.broadcast %23 : vector<16x1xf32> to vector<16x128xf32>
    %25 = arith.subf %21, %24 : vector<16x128xf32>
    %26 = math.exp %25 : vector<16x128xf32>
    %cst_18 = arith.constant dense<0.000000e+00> : vector<16xf32>
    %27 = vector.multi_reduction <add>, %26, %cst_18 [1] : vector<16x128xf32> to vector<16xf32>
    %28 = vector.shape_cast %27 : vector<16xf32> to vector<16x1xf32>
    %29 = vector.broadcast %28 : vector<16x1xf32> to vector<16x128xf32>
    %30 = arith.divf %26, %29 : vector<16x128xf32>
    %31 = arith.truncf %30 : vector<16x128xf32> to vector<16x128xbf16>
    %c0_19 = arith.constant 0 : index
    %c0_20 = arith.constant 0 : index
    %32 = vector.load %arg8[%c0_19, %c0_20] : memref<16x128xbf16, #tpu.memory_space<vmem>>, vector<16x128xbf16>
    tpu.vector_store %arg8[%c0_19, %c0_20], %31 {strides = array<i32>} : memref<16x128xbf16, #tpu.memory_space<vmem>>, vector<16x128xbf16>,
    return
  }
  func.func @transform_0(%arg0: i32) -> (i32, i32) {
    %c0_i32 = arith.constant 0 : i32
    %c0_i32_0 = arith.constant 0 : i32
    return %arg0, %c0_i32 : i32, i32
  }
  func.func @transform_1(%arg0: i32) -> (i32, i32) {
    %c0_i32 = arith.constant 0 : i32
    %c0_i32_0 = arith.constant 0 : i32
    %c0_i32_1 = arith.constant 0 : i32
    return %c0_i32, %c0_i32_0 : i32, i32
  }
  func.func @transform_2(%arg0: i32) -> (i32, i32) {
    %c0_i32 = arith.constant 0 : i32
    %c0_i32_0 = arith.constant 0 : i32
    %c0_i32_1 = arith.constant 0 : i32
    return %c0_i32, %c0_i32_0 : i32, i32
  }
  func.func @transform_3(%arg0: i32) -> (i32, i32) {
    %c0_i32 = arith.constant 0 : i32
    %c0_i32_0 = arith.constant 0 : i32
    %c0_i32_1 = arith.constant 0 : i32
    return %c0_i32, %c0_i32_0 : i32, i32
  }
  func.func @transform_4(%arg0: i32) -> (i32, i32) {
    %c0_i32 = arith.constant 0 : i32
    %c0_i32_0 = arith.constant 0 : i32
    %c0_i32_1 = arith.constant 0 : i32
    return %c0_i32, %c0_i32_0 : i32, i32
  }
  func.func @transform_5(%arg0: i32) -> (i32, i32) {
    %c0_i32 = arith.constant 0 : i32
    %c0_i32_0 = arith.constant 0 : i32
    %c0_i32_1 = arith.constant 0 : i32
    return %c0_i32, %c0_i32_0 : i32, i32
  }
  func.func @transform_6(%arg0: i32) -> (i32, i32) {
    %c0_i32 = arith.constant 0 : i32
    %c0_i32_0 = arith.constant 0 : i32
    %c0_i32_1 = arith.constant 0 : i32
    return %c0_i32, %c0_i32_0 : i32, i32
  }
  func.func @transform_7(%arg0: i32) -> (i32, i32) {
    %c0_i32 = arith.constant 0 : i32
    %c0_i32_0 = arith.constant 0 : i32
    return %arg0, %c0_i32 : i32, i32
  }
}

</mosaic_0001>

<llo_original>
// kernel: policy_net_forward.1
$region0: #{policy_net_forward.1}
  #allocation0 [shape = 'u32[]', space=smem, size = 0x4, offset = 0x4, fixed_abs, tag = 'smem constant byte address 0x4 - core index']
  #allocation1 [shape = 'u32[144,128]{1,0:T(1,128)}', space=vmem, size = 0x12000, scoped, tag = 'internal scratch']
  %s0 = inlined_call_operand.vmem [shape: f32[16,4], index: 0, kind: input, shape index: {}]
  %s1 = inlined_call_operand.vmem [shape: f32[4,128], index: 1, kind: input, shape index: {}]
  %s2 = inlined_call_operand.vmem [shape: f32[1,128], index: 2, kind: input, shape index: {}]
  %s3 = inlined_call_operand.hbm [shape: bf16[128,256], index: 3, kind: input, shape index: {}]
  %s4 = inlined_call_operand.vmem [shape: f32[1,256], index: 4, kind: input, shape index: {}]
  %s5 = inlined_call_operand.hbm [shape: bf16[256,128], index: 5, kind: input, shape index: {}]
  %s6 = inlined_call_operand.vmem [shape: f32[1,128], index: 6, kind: input, shape index: {}]
  %s7 = inlined_call_operand.vmem [shape: bf16[16,128], index: 7, kind: output, shape index: {}]
  %s8 = sld [smem:[#allocation0]]
  $region46: #{policy_net_forward.1} parent=0
    _
  %s10 = ssub.s32 1, %s8
  %s11 = scalar_select 0, %s10, %s8
  $region1: #{policy_net_forward.1} parent=0
    #allocation2 [shape = 'u8[65536]{0}', space=vmem, size = 0x10000, scoped, tag = 'input window, operand 3, single buffered']
    #allocation3 [shape = 's32[1]{0}', space=sflag, size = 0x4, scoped, tag = 'scoped memory for policy_net_forward.1']
    #allocation4 [shape = 'u8[65536]{0}', space=vmem, size = 0x10000, scoped, tag = 'input window, operand 5, single buffered']
    #allocation5 [shape = 's32[1]{0}', space=sflag, size = 0x4, scoped, tag = 'scoped memory for policy_net_forward.1']
    %12 = vsyncpa [#allocation3], 0
    %13 = vsyncpa [#allocation5], 0
    // Predicated region
    $region2: #{policy_net_forward.1} parent=1 // pred_check
      _
    $region3: #{policy_net_forward.1} parent=1 // pred_check_branch
      %15 = sbr.rel (0) target = $region5
    $region4: #{policy_net_forward.1} parent=1 // pred_region
      _
    $region5: #{policy_net_forward.1} parent=1 // pred_fallthru
      _
    // Predicated region
    $region6: #{policy_net_forward.1} parent=1 // pred_check
      _
    $region7: #{policy_net_forward.1} parent=1 // pred_check_branch
      %17 = sbr.rel (0) target = $region9
    $region8: #{policy_net_forward.1} parent=1 // pred_region
      _
    $region9: #{policy_net_forward.1} parent=1 // pred_fallthru
      _
    // Predicated region
    $region10: #{policy_net_forward.1} parent=1 // pred_check
      _
    $region11: #{policy_net_forward.1} parent=1 // pred_check_branch
      %19 = sbr.rel (0) target = $region13
    $region12: #{policy_net_forward.1} parent=1 // pred_region
      _
    $region13: #{policy_net_forward.1} parent=1 // pred_fallthru
      _
    // Predicated region
    $region14: #{policy_net_forward.1} parent=1 // pred_check
      _
    $region15: #{policy_net_forward.1} parent=1 // pred_check_branch
      %21 = sbr.rel (0) target = $region17
    $region16: #{policy_net_forward.1} parent=1 // pred_region
      %s23 = ssub.s32 2048, 2048
      %24 = vsyncadd [#allocation3], %s23
      %s25 = sshll.u32 [#allocation2], 4
      %s26 = int_to_ptr.vmem [resolvable:$true] %s25
      %31 = dma.hbm_to_vmem [thread:$0]  %s3, 2048, %s26, [#allocation3], 128, 128, 8
    $region17: #{policy_net_forward.1} parent=1 // pred_fallthru
      _
    // Predicated region
    $region18: #{policy_net_forward.1} parent=1 // pred_check
      _
    $region19: #{policy_net_forward.1} parent=1 // pred_check_branch
      %33 = sbr.rel (0) target = $region21
    $region20: #{policy_net_forward.1} parent=1 // pred_region
      _
    $region21: #{policy_net_forward.1} parent=1 // pred_fallthru
      _
    // Predicated region
    $region22: #{policy_net_forward.1} parent=1 // pred_check
      _
    $region23: #{policy_net_forward.1} parent=1 // pred_check_branch
      %35 = sbr.rel (0) target = $region25
    $region24: #{policy_net_forward.1} parent=1 // pred_region
      %s37 = ssub.s32 2048, 2048
      %38 = vsyncadd [#allocation5], %s37
      %s39 = sshll.u32 [#allocation4], 4
      %s40 = int_to_ptr.vmem [resolvable:$true] %s39
      %45 = dma.hbm_to_vmem [thread:$0]  %s5, 2048, %s40, [#allocation5], 64, 64, 4
    $region25: #{policy_net_forward.1} parent=1 // pred_fallthru
      _
    // Predicated region
    $region26: #{policy_net_forward.1} parent=1 // pred_check
      _
    $region27: #{policy_net_forward.1} parent=1 // pred_check_branch
      %47 = sbr.rel (0) target = $region29
    $region28: #{policy_net_forward.1} parent=1 // pred_region
      _
    $region29: #{policy_net_forward.1} parent=1 // pred_fallthru
      _
    // Predicated region
    $region30: #{policy_net_forward.1} parent=1 // pred_check
      _
    $region31: #{policy_net_forward.1} parent=1 // pred_check_branch
      %49 = sbr.rel (0) target = $region33
    $region32: #{policy_net_forward.1} parent=1 // pred_region
      %50 = dma.done [#allocation3], 2048
    $region33: #{policy_net_forward.1} parent=1 // pred_fallthru
      _
    // Predicated region
    $region34: #{policy_net_forward.1} parent=1 // pred_check
      _
    $region35: #{policy_net_forward.1} parent=1 // pred_check_branch
      %52 = sbr.rel (0) target = $region37
    $region36: #{policy_net_forward.1} parent=1 // pred_region
      %53 = dma.done [#allocation5], 2048
    $region37: #{policy_net_forward.1} parent=1 // pred_fallthru
      _
    %v55 = vld [vmem:[%s0] sm:$0xff]
    %v56 = vld [vmem:[%s0 + $0x8] sm:$0xff]
    %v57 = vld [vmem:[%s1] sm:$0xf]
    %v58 = vld [vmem:[%s2] sm:$0x1]
    %v60 = vlaneseq
    %v61 = vshrl.u32 %v60, 7
    %v62 = vsub.s32 0, %v61
    %v63 = vrot.slane %v58, %v62
    %vm65 = vcmask 31744
    %v67 = vsel %vm65, %v55, 0
    %v70 = vsel %vm65, %v56, 0
    %vm72 = vcmask 1043456
    %v74 = vsel %vm72, %v57, 0
    %76 = vmatprep.subr.mxu0 0.0
    %77 = vmatpush1.msra.mxu0 %v74
    %78 = vmatprep.subr.mxu0 0.0
    %79 = vmatpush1.msra.mxu0 0.0
    %80 = vmatprep.subr.mxu0 0.0
    %81 = vmatpush1.msra.mxu0 0.0
    %82 = vmatprep.subr.mxu0 0.0
    %83 = vmatpush1.msra.mxu0 0.0
    %84 = vmatprep.subr.mxu0 0.0
    %85 = vmatpush1.msra.mxu0 0.0
    %86 = vmatprep.subr.mxu0 0.0
    %87 = vmatpush1.msra.mxu0 0.0
    %88 = vmatprep.subr.mxu0 0.0
    %89 = vmatpush1.msra.mxu0 0.0
    %90 = vmatprep.subr.mxu0 0.0
    %91 = vmatpush1.msra.mxu0 0.0
    %92 = vmatprep.subr.mxu0 0.0
    %93 = vmatpush1.msra.mxu0 0.0
    %94 = vmatprep.subr.mxu0 0.0
    %95 = vmatpush1.msra.mxu0 0.0
    %96 = vmatprep.subr.mxu0 0.0
    %97 = vmatpush1.msra.mxu0 0.0
    %98 = vmatprep.subr.mxu0 0.0
    %99 = vmatpush1.msra.mxu0 0.0
    %100 = vmatprep.subr.mxu0 0.0
    %101 = vmatpush1.msra.mxu0 0.0
    %102 = vmatprep.subr.mxu0 0.0
    %103 = vmatpush1.msra.mxu0 0.0
    %104 = vmatprep.subr.mxu0 0.0
    %105 = vmatpush1.msra.mxu0 0.0
    %106 = vmatprep.subr.mxu0 0.0
    %107 = vmatpush1.msra.mxu0 0.0
    %108 = vmatprep.subr.mxu0 0.0
    %109 = vmatpush1.msra.mxu0 0.0
    %110 = vmatprep.subr.mxu0 0.0
    %111 = vmatpush1.msra.mxu0 0.0
    %112 = vmatprep.subr.mxu0 0.0
    %113 = vmatpush1.msra.mxu0 0.0
    %114 = vmatprep.subr.mxu0 0.0
    %115 = vmatpush1.msra.mxu0 0.0
    %116 = vmatprep.subr.mxu0 0.0
    %117 = vmatpush1.msra.mxu0 0.0
    %118 = vmatprep.subr.mxu0 0.0
    %119 = vmatpush1.msra.mxu0 0.0
    %120 = vmatprep.subr.mxu0 0.0
    %121 = vmatpush1.msra.mxu0 0.0
    %122 = vmatprep.subr.mxu0 0.0
    %123 = vmatpush1.msra.mxu0 0.0
    %124 = vmatprep.subr.mxu0 0.0
    %125 = vmatpush1.msra.mxu0 0.0
    %126 = vmatprep.subr.mxu0 0.0
    %127 = vmatpush1.msra.mxu0 0.0
    %128 = vmatprep.subr.mxu0 0.0
    %129 = vmatpush1.msra.mxu0 0.0
    %130 = vmatprep.subr.mxu0 0.0
    %131 = vmatpush1.msra.mxu0 0.0
    %132 = vmatprep.subr.mxu0 0.0
    %133 = vmatpush1.msra.mxu0 0.0
    %134 = vmatprep.subr.mxu0 0.0
    %135 = vmatpush1.msra.mxu0 0.0
    %136 = vmatprep.subr.mxu0 0.0
    %137 = vmatpush1.msra.mxu0 0.0
    %138 = vmatprep.subr.mxu0 0.0
    %139 = vmatpush1.msra.mxu0 0.0
    %140 = vmatprep.mubr.f32.mxu0 0.0
    %141 = vmatmul.mubr.f32.gmra.mrb[0].mxu0 %v67
    %v142 = vpop.f32.mrb[0].mxu0
    %v143 = vadd.f32 %v63, %v142
    %v144 = vpop.f32.mrb[0].mxu0
    %145 = vmatprep.mubr.f32.mxu0 0.0
    %146 = vmatmul.mubr.f32.gmra.mrb[0].mxu0 %v70
    %v147 = vpop.f32.mrb[0].mxu0
    %v148 = vadd.f32 %v63, %v147
    %v149 = vpop.f32.mrb[0].mxu0
    %150 = vdwg.mxu0
    %v151 = vmax.f32 %v143, 0.0
    %v152 = vmax.f32 %v148, 0.0
    %v153 = vpack.c.bf16 %v152, %v151
    %v154 = vld [vmem:[#allocation2] sm:$0xff]
    %v155 = vld [vmem:[#allocation2 + $0x8] sm:$0xff]
    %v156 = vld [vmem:[#allocation2 + $0x10] sm:$0xff]
    %v157 = vld [vmem:[#allocation2 + $0x18] sm:$0xff]
    %v158 = vld [vmem:[#allocation2 + $0x20] sm:$0xff]
    %v159 = vld [vmem:[#allocation2 + $0x28] sm:$0xff]
    %v160 = vld [vmem:[#allocation2 + $0x30] sm:$0xff]
    %v161 = vld [vmem:[#allocation2 + $0x38] sm:$0xff]
    %v162 = vld [vmem:[#allocation2 + $0x40] sm:$0xff]
    %v163 = vld [vmem:[#allocation2 + $0x48] sm:$0xff]
    %v164 = vld [vmem:[#allocation2 + $0x50] sm:$0xff]
    %v165 = vld [vmem:[#allocation2 + $0x58] sm:$0xff]
    %v166 = vld [vmem:[#allocation2 + $0x60] sm:$0xff]
    %v167 = vld [vmem:[#allocation2 + $0x68] sm:$0xff]
    %v168 = vld [vmem:[#allocation2 + $0x70] sm:$0xff]
    %v169 = vld [vmem:[#allocation2 + $0x78] sm:$0xff]
    %v170 = vld [vmem:[%s4] sm:$0x3]
    %v172 = vlaneseq
    %v173 = vshrl.u32 %v172, 7
    %v174 = vsub.s32 0, %v173
    %v175 = vrot.slane %v170, %v174
    %v176 = vlaneseq
    %v177 = vshrl.u32 %v176, 7
    %v178 = vsub.s32 1, %v177
    %v179 = vrot.slane %v170, %v178
    %v198 = vunpack.c.l.b16 %v154
    %v199 = vunpack.c.h.b16 %v154
    %v200 = vunpack.c.l.b16 %v155
    %v201 = vunpack.c.h.b16 %v155
    %v202 = vunpack.c.l.b16 %v156
    %v203 = vunpack.c.h.b16 %v156
    %v204 = vunpack.c.l.b16 %v157
    %v205 = vunpack.c.h.b16 %v157
    %v206 = vunpack.c.l.b16 %v158
    %v207 = vunpack.c.h.b16 %v158
    %v208 = vunpack.c.l.b16 %v159
    %v209 = vunpack.c.h.b16 %v159
    %v210 = vunpack.c.l.b16 %v160
    %v211 = vunpack.c.h.b16 %v160
    %v212 = vunpack.c.l.b16 %v161
    %v213 = vunpack.c.h.b16 %v161
    %v214 = vunpack.c.l.b16 %v162
    %v215 = vunpack.c.h.b16 %v162
    %v216 = vunpack.c.l.b16 %v163
    %v217 = vunpack.c.h.b16 %v163
    %v218 = vunpack.c.l.b16 %v164
    %v219 = vunpack.c.h.b16 %v164
    %v220 = vunpack.c.l.b16 %v165
    %v221 = vunpack.c.h.b16 %v165
    %v222 = vunpack.c.l.b16 %v166
    %v223 = vunpack.c.h.b16 %v166
    %v224 = vunpack.c.l.b16 %v167
    %v225 = vunpack.c.h.b16 %v167
    %v226 = vunpack.c.l.b16 %v168
    %v227 = vunpack.c.h.b16 %v168
    %v228 = vunpack.c.l.b16 %v169
    %v229 = vunpack.c.h.b16 %v169
    %v230 = vpack.c.b16 %v200, %v198
    %v231 = vpack.c.b16 %v201, %v199
    %v232 = vpack.c.b16 %v204, %v202
    %v233 = vpack.c.b16 %v205, %v203
    %v234 = vpack.c.b16 %v208, %v206
    %v235 = vpack.c.b16 %v209, %v207
    %v236 = vpack.c.b16 %v212, %v210
    %v237 = vpack.c.b16 %v213, %v211
    %v238 = vpack.c.b16 %v216, %v214
    %v239 = vpack.c.b16 %v217, %v215
    %v240 = vpack.c.b16 %v220, %v218
    %v241 = vpack.c.b16 %v221, %v219
    %v242 = vpack.c.b16 %v224, %v222
    %v243 = vpack.c.b16 %v225, %v223
    %v244 = vpack.c.b16 %v228, %v226
    %v245 = vpack.c.b16 %v229, %v227
    %262 = vmatprep.subr.bf16.mxu0 %v231
    %263 = vmatpush1.bf16.msra.mxu0 %v230
    %264 = vmatprep.subr.bf16.mxu0 %v233
    %265 = vmatpush1.bf16.msra.mxu0 %v232
    %266 = vmatprep.subr.bf16.mxu0 %v235
    %267 = vmatpush1.bf16.msra.mxu0 %v234
    %268 = vmatprep.subr.bf16.mxu0 %v237
    %269 = vmatpush1.bf16.msra.mxu0 %v236
    %270 = vmatprep.subr.bf16.mxu0 %v239
    %271 = vmatpush1.bf16.msra.mxu0 %v238
    %272 = vmatprep.subr.bf16.mxu0 %v241
    %273 = vmatpush1.bf16.msra.mxu0 %v240
    %274 = vmatprep.subr.bf16.mxu0 %v243
    %275 = vmatpush1.bf16.msra.mxu0 %v242
    %276 = vmatprep.subr.bf16.mxu0 %v245
    %277 = vmatpush1.bf16.msra.mxu0 %v244
    %278 = vmatprep.subr.bf16.mxu0 0
    %279 = vmatpush1.bf16.msra.mxu0 0
    %280 = vmatprep.subr.bf16.mxu0 0
    %281 = vmatpush1.bf16.msra.mxu0 0
    %282 = vmatprep.subr.bf16.mxu0 0
    %283 = vmatpush1.bf16.msra.mxu0 0
    %284 = vmatprep.subr.bf16.mxu0 0
    %285 = vmatpush1.bf16.msra.mxu0 0
    %286 = vmatprep.subr.bf16.mxu0 0
    %287 = vmatpush1.bf16.msra.mxu0 0
    %288 = vmatprep.subr.bf16.mxu0 0
    %289 = vmatpush1.bf16.msra.mxu0 0
    %290 = vmatprep.subr.bf16.mxu0 0
    %291 = vmatpush1.bf16.msra.mxu0 0
    %292 = vmatprep.subr.bf16.mxu0 0
    %293 = vmatpush1.bf16.msra.mxu0 0
    %294 = vmatprep.mubr.bf16.mxu0 0
    %295 = vmatmul.mubr.bf16.gmra.mrb[0].mxu0 %v153
    %v296 = vpop.f32.mrb[0].mxu0
    %v297 = vadd.f32 %v175, %v296
    %v298 = vpop.f32.mrb[0].mxu0
    %v299 = vadd.f32 %v179, %v298
    %v300 = vpop.f32.mrb[0].mxu0
    %v301 = vadd.f32 %v175, %v300
    %v302 = vpop.f32.mrb[0].mxu0
    %v303 = vadd.f32 %v179, %v302
    %304 = vdwg.mxu0
    %v305 = vmax.f32 %v297, 0.0
    %v306 = vmax.f32 %v299, 0.0
    %v307 = vmax.f32 %v301, 0.0
    %v308 = vmax.f32 %v303, 0.0
    %v309 = vpack.c.bf16 %v307, %v305
    %v310 = vpack.c.bf16 %v308, %v306
    %v311 = vld [vmem:[#allocation4] sm:$0xf]
    %v312 = vld [vmem:[#allocation4 + $0x4] sm:$0xf]
    %v313 = vld [vmem:[#allocation4 + $0x8] sm:$0xf]
    %v314 = vld [vmem:[#allocation4 + $0xc] sm:$0xf]
    %v315 = vld [vmem:[#allocation4 + $0x10] sm:$0xf]
    %v316 = vld [vmem:[#allocation4 + $0x14] sm:$0xf]
    %v317 = vld [vmem:[#allocation4 + $0x18] sm:$0xf]
    %v318 = vld [vmem:[#allocation4 + $0x1c] sm:$0xf]
    %v319 = vld [vmem:[#allocation4 + $0x20] sm:$0xf]
    %v320 = vld [vmem:[#allocation4 + $0x24] sm:$0xf]
    %v321 = vld [vmem:[#allocation4 + $0x28] sm:$0xf]
    %v322 = vld [vmem:[#allocation4 + $0x2c] sm:$0xf]
    %v323 = vld [vmem:[#allocation4 + $0x30] sm:$0xf]
    %v324 = vld [vmem:[#allocation4 + $0x34] sm:$0xf]
    %v325 = vld [vmem:[#allocation4 + $0x38] sm:$0xf]
    %v326 = vld [vmem:[#allocation4 + $0x3c] sm:$0xf]
    %v327 = vld [vmem:[#allocation4 + $0x40] sm:$0xf]
    %v328 = vld [vmem:[#allocation4 + $0x44] sm:$0xf]
    %v329 = vld [vmem:[#allocation4 + $0x48] sm:$0xf]
    %v330 = vld [vmem:[#allocation4 + $0x4c] sm:$0xf]
    %v331 = vld [vmem:[#allocation4 + $0x50] sm:$0xf]
    %v332 = vld [vmem:[#allocation4 + $0x54] sm:$0xf]
    %v333 = vld [vmem:[#allocation4 + $0x58] sm:$0xf]
    %v334 = vld [vmem:[#allocation4 + $0x5c] sm:$0xf]
    %v335 = vld [vmem:[#allocation4 + $0x60] sm:$0xf]
    %v336 = vld [vmem:[#allocation4 + $0x64] sm:$0xf]
    %v337 = vld [vmem:[#allocation4 + $0x68] sm:$0xf]
    %v338 = vld [vmem:[#allocation4 + $0x6c] sm:$0xf]
    %v339 = vld [vmem:[#allocation4 + $0x70] sm:$0xf]
    %v340 = vld [vmem:[#allocation4 + $0x74] sm:$0xf]
    %v341 = vld [vmem:[#allocation4 + $0x78] sm:$0xf]
    %v342 = vld [vmem:[#allocation4 + $0x7c] sm:$0xf]
    %v343 = vld [vmem:[%s6] sm:$0x1]
    %v345 = vlaneseq
    %v346 = vshrl.u32 %v345, 7
    %v347 = vsub.s32 0, %v346
    %v348 = vrot.slane %v343, %v347
    %v382 = vunpack.c.l.b16 %v311
    %v383 = vunpack.c.l.b16 %v312
    %v384 = vunpack.c.l.b16 %v313
    %v385 = vunpack.c.l.b16 %v314
    %v386 = vunpack.c.l.b16 %v315
    %v387 = vunpack.c.l.b16 %v316
    %v388 = vunpack.c.l.b16 %v317
    %v389 = vunpack.c.l.b16 %v318
    %v390 = vunpack.c.l.b16 %v319
    %v391 = vunpack.c.l.b16 %v320
    %v392 = vunpack.c.l.b16 %v321
    %v393 = vunpack.c.l.b16 %v322
    %v394 = vunpack.c.l.b16 %v323
    %v395 = vunpack.c.l.b16 %v324
    %v396 = vunpack.c.l.b16 %v325
    %v397 = vunpack.c.l.b16 %v326
    %v398 = vunpack.c.l.b16 %v327
    %v399 = vunpack.c.l.b16 %v328
    %v400 = vunpack.c.l.b16 %v329
    %v401 = vunpack.c.l.b16 %v330
    %v402 = vunpack.c.l.b16 %v331
    %v403 = vunpack.c.l.b16 %v332
    %v404 = vunpack.c.l.b16 %v333
    %v405 = vunpack.c.l.b16 %v334
    %v406 = vunpack.c.l.b16 %v335
    %v407 = vunpack.c.l.b16 %v336
    %v408 = vunpack.c.l.b16 %v337
    %v409 = vunpack.c.l.b16 %v338
    %v410 = vunpack.c.l.b16 %v339
    %v411 = vunpack.c.l.b16 %v340
    %v412 = vunpack.c.l.b16 %v341
    %v413 = vunpack.c.l.b16 %v342
    %v414 = vpack.c.b16 %v383, %v382
    %v415 = vpack.c.b16 %v385, %v384
    %v416 = vpack.c.b16 %v387, %v386
    %v417 = vpack.c.b16 %v389, %v388
    %v418 = vpack.c.b16 %v391, %v390
    %v419 = vpack.c.b16 %v393, %v392
    %v420 = vpack.c.b16 %v395, %v394
    %v421 = vpack.c.b16 %v397, %v396
    %v422 = vpack.c.b16 %v399, %v398
    %v423 = vpack.c.b16 %v401, %v400
    %v424 = vpack.c.b16 %v403, %v402
    %v425 = vpack.c.b16 %v405, %v404
    %v426 = vpack.c.b16 %v407, %v406
    %v427 = vpack.c.b16 %v409, %v408
    %v428 = vpack.c.b16 %v411, %v410
    %v429 = vpack.c.b16 %v413, %v412
    %446 = vmatprep.subr.bf16.mxu0 0
    %447 = vmatpush1.bf16.msra.mxu0 %v414
    %448 = vmatprep.subr.bf16.mxu0 0
    %449 = vmatpush1.bf16.msra.mxu0 %v415
    %450 = vmatprep.subr.bf16.mxu0 0
    %451 = vmatpush1.bf16.msra.mxu0 %v416
    %452 = vmatprep.subr.bf16.mxu0 0
    %453 = vmatpush1.bf16.msra.mxu0 %v417
    %454 = vmatprep.subr.bf16.mxu0 0
    %455 = vmatpush1.bf16.msra.mxu0 %v418
    %456 = vmatprep.subr.bf16.mxu0 0
    %457 = vmatpush1.bf16.msra.mxu0 %v419
    %458 = vmatprep.subr.bf16.mxu0 0
    %459 = vmatpush1.bf16.msra.mxu0 %v420
    %460 = vmatprep.subr.bf16.mxu0 0
    %461 = vmatpush1.bf16.msra.mxu0 %v421
    %462 = vmatprep.subr.bf16.mxu0 0
    %463 = vmatpush1.bf16.msra.mxu0 %v422
    %464 = vmatprep.subr.bf16.mxu0 0
    %465 = vmatpush1.bf16.msra.mxu0 %v423
    %466 = vmatprep.subr.bf16.mxu0 0
    %467 = vmatpush1.bf16.msra.mxu0 %v424
    %468 = vmatprep.subr.bf16.mxu0 0
    %469 = vmatpush1.bf16.msra.mxu0 %v425
    %470 = vmatprep.subr.bf16.mxu0 0
    %471 = vmatpush1.bf16.msra.mxu0 %v426
    %472 = vmatprep.subr.bf16.mxu0 0
    %473 = vmatpush1.bf16.msra.mxu0 %v427
    %474 = vmatprep.subr.bf16.mxu0 0
    %475 = vmatpush1.bf16.msra.mxu0 %v428
    %476 = vmatprep.subr.bf16.mxu0 0
    %477 = vmatpush1.bf16.msra.mxu0 %v429
    %478 = vmatprep.mubr.bf16.mxu0 %v310
    %479 = vmatmul.mubr.bf16.gmra.mrb[0].mxu0 %v309
    %v480 = vpop.f32.mrb[0].mxu0
    %v481 = vadd.f32 %v348, %v480
    %v482 = vpop.f32.mrb[0].mxu0
    %v483 = vpop.f32.mrb[0].mxu0
    %v484 = vadd.f32 %v348, %v483
    %v485 = vpop.f32.mrb[0].mxu0
    %486 = vdwg.mxu0
    %487 = vmax.xlane.f32.xlu0 %v481
    %v488 = vpop.xlane.xlu0 %487
    %489 = vmax.xlane.f32.xlu0 %v484
    %v490 = vpop.xlane.xlu0 %489
    %v491 = vsub.f32 %v481, %v488
    %v492 = vsub.f32 %v484, %v490
    %v493 = vmul.f32 %v491, 1.442695
    %v494 = vpow.pop %v493
    %v495 = vmul.f32 %v492, 1.442695
    %v496 = vpow.pop %v495
    %497 = vadd.xlane.f32.xlu0 %v494
    %v498 = vpop.xlane.xlu0 %497
    %499 = vadd.xlane.f32.xlu0 %v496
    %v500 = vpop.xlane.xlu0 %499
    %v501 = vrcp.pop %v498
    %v502 = vmul.f32 %v494, %v501
    %v503 = vrcp.pop %v500
    %v504 = vmul.f32 %v496, %v503
    %v505 = vpack.c.bf16 %v504, %v502
    %v507 = vunpack.c.l.b16 %v505
    %v508 = vunpack.c.h.b16 %v505
    %v509 = vpack.c.b16 %v507, %v507
    %v510 = vpack.c.b16 %v508, %v508
    %513 = vst [vmem:[%s7] sm:$0xf] %v509
    %514 = vst [vmem:[%s7 + $0x4] sm:$0xf] %v510
    // Predicated region
    $region38: #{policy_net_forward.1} parent=1 // pred_check
      _
    $region39: #{policy_net_forward.1} parent=1 // pred_check_branch
      %516 = sbr.rel (0) target = $region41
    $region40: #{policy_net_forward.1} parent=1 // pred_region
      _
    $region41: #{policy_net_forward.1} parent=1 // pred_fallthru
      _
    // Predicated region
    $region42: #{policy_net_forward.1} parent=1 // pred_check
      _
    $region43: #{policy_net_forward.1} parent=1 // pred_check_branch
      %518 = sbr.rel (0) target = $region45
    $region44: #{policy_net_forward.1} parent=1 // pred_region
      _
    $region45: #{policy_net_forward.1} parent=1 // pred_fallthru
      _
    %519 = vsyncpa [#allocation3], 1
    %520 = vsyncpa [#allocation5], 1

</llo_original>
